<compile_context>
chip_gen: v6e
topology: v6e:2x2x1
jax: 0.10.0
libtpu: 0.0.40
codegen_flags: <defaults>
</compile_context>

<pallas_src>
import functools

import jax
import jax.numpy as jnp
from jax import lax
from jax.experimental import pallas as pl
from jax.experimental.pallas import tpu as pltpu


LANES = 128
SUBLANES = 8


def _bias_reduce_kernel(x_ref, y_ref, o_ref, acc_ref, *, n_rows, r_rows, tn, tr):
    """Grid: (feature-tile j ["parallel"], batch-chunk i ["arbitrary", reduction]).

    x_ref: (tn, tr, 128)   y_ref: (1, tr, 128)   o_ref: (8, 128)
    acc_ref: VMEM (tr, 128) f32 -- running column sum of x over the batch axis.
    """
    j = pl.program_id(0)
    i = pl.program_id(1)

    @pl.when(i == 0)
    def _init():
        acc_ref[...] = jnp.zeros_like(acc_ref)

    x = x_ref[...].astype(jnp.float32)                       # (tn, tr, 128)

    # Ragged batch chunk (static check): zero rows past the true batch extent
    # *before* they enter the column sum.
    if n_rows % tn:
        row = lax.broadcasted_iota(jnp.int32, (tn, tr, LANES), 0)
        x = jnp.where((i * tn + row) < n_rows, x, jnp.float32(0.0))

    # Batch sum over the (untiled) leading axis: pure full-vreg VPU adds,
    # hidden under the HBM DMA.
    acc_ref[...] = acc_ref[...] + jnp.sum(x, axis=0)

    @pl.when(i == pl.num_programs(1) - 1)
    def _finalize():
        avg = acc_ref[...] * jnp.float32(1.0 / n_rows)        # (tr, 128)
        diff = avg - y_ref[0].astype(jnp.float32)             # (tr, 128)
        sq = diff * diff

        # Ragged last feature tile (static check): mask feature-rows past R
        # immediately on sq, before any reduction.
        if r_rows % tr:
            frow = lax.broadcasted_iota(jnp.int32, (tr, LANES), 0)
            sq = jnp.where((j * tr + frow) < r_rows, sq, jnp.float32(0.0))

        # Reduce (tr, 128) -> (8, 128): a short tree of full-vreg adds over
        # sublane-aligned slices (no cross-lane XLU work, no 1-sublane strips).
        groups = [sq[g * SUBLANES:(g + 1) * SUBLANES, :]
                  for g in range(tr // SUBLANES)]
        while len(groups) > 1:
            nxt = [a + b for a, b in zip(groups[0::2], groups[1::2])]
            if len(groups) % 2:
                nxt.append(groups[-1])
            groups = nxt
        o_ref[...] = groups[0]                                # (8, 128), lane-dense


def _vmem_capacity_bytes(default=64 * 1024 * 1024):
    """Physical per-core VMEM; conservative 64 MiB fallback (fits every gen)."""
    try:
        info = pltpu.get_tpu_info()
        cap = getattr(info, "vmem_capacity_bytes", None)
        if cap:
            return int(cap)
    except Exception:
        pass
    return default


def _pick_tiles(n_rows, r_rows, vmem_budget_bytes, *, min_f_steps=8, max_tile_r=512):
    """Return (tn, tr): batch-chunk rows and feature rows (128 lanes each) per tile."""
    row_bytes = LANES * 4                                  # one f32 feature row
    r8 = max(SUBLANES, (r_rows // SUBLANES) * SUBLANES)

    # Batch chunking only when even a minimum-width (tr=8) double-buffered x
    # block would overflow the budget (keeps v7x inside its 64 MiB VMEM).
    max_tn = max(1, (vmem_budget_bytes // (SUBLANES * row_bytes) - 3) // 2)
    tn = min(n_rows, max_tn)

    # Widest 8-aligned feature tile fitting the budget (x & y double-buffered
    # plus the accumulator); capped, and never wider than the array.  Small N
    # therefore gets very wide tiles (up to 512 rows = 65536 lanes).
    tr = vmem_budget_bytes // (row_bytes * (2 * tn + 3))
    tr = max(SUBLANES, (tr // SUBLANES) * SUBLANES)
    tr = min(tr, max_tile_r, r8)

    # Megacore-aware step count: keep >= min_f_steps feature tiles when R is
    # big enough so both v7x TensorCores run a full software pipeline.
    while (tr > SUBLANES and pl.cdiv(r_rows, tr) < min_f_steps
           and r_rows >= min_f_steps * SUBLANES):
        tr = max(SUBLANES, ((tr // 2) // SUBLANES) * SUBLANES)
    return tn, tr


def bias_reduce_loss(x, y, weight=1.0, *, tile_n=None, tile_r=None):
    """x: (N, C, H, W), y: (1, C, H, W). Returns float32 loss of shape (1,)."""
    N, C, H, W = x.shape
    assert y.shape == (1, C, H, W), (x.shape, y.shape)
    F = C * H * W

    # Feature rows of 128 lanes; keep at least 8 so blocks satisfy (8,128) tiling.
    R = max(pl.cdiv(F, LANES), SUBLANES)
    F_pad = R * LANES

    if F_pad == F:
        x3 = x.reshape(N, R, LANES)                        # free, contiguous view
        y3 = y.reshape(1, R, LANES)
    else:
        # Ragged feature extent: zero-pad (exactly-zero contribution to the
        # squared error; the true F is used for the MSE mean).  Costs one extra
        # pass over x only in this uncommon case.
        x3 = jnp.pad(x.reshape(N, F), ((0, 0), (0, F_pad - F))).reshape(N, R, LANES)
        y3 = jnp.pad(y.reshape(1, F), ((0, 0), (0, F_pad - F))).reshape(1, R, LANES)

    cap = _vmem_capacity_bytes()
    budget = min(48 * 1024 * 1024, max(16 * 1024 * 1024, cap // 3))
    tn_auto, tr_auto = _pick_tiles(N, R, budget)
    tn = int(tile_n) if tile_n is not None else tn_auto
    tr = int(tile_r) if tile_r is not None else tr_auto
    assert 1 <= tn <= N, (tn, N)
    assert tr % SUBLANES == 0 and SUBLANES <= tr <= R, (tr, R)

    num_f_tiles = pl.cdiv(R, tr)
    num_n_chunks = pl.cdiv(N, tn)

    kernel = functools.partial(_bias_reduce_kernel,
                               n_rows=N, r_rows=R, tn=tn, tr=tr)

    # VMEM limit: cover the double-buffered pipeline footprint with headroom,
    # but never more than 3/4 of physical VMEM (leaves Mosaic scratch room on v7x).
    footprint = (2 * 4 * (tn * tr * LANES + tr * LANES + SUBLANES * LANES)
                 + 4 * tr * LANES)
    vmem_limit = int(min(3 * cap // 4, max(2 * footprint, 16 * 1024 * 1024)))

    partials = pl.pallas_call(
        kernel,
        out_shape=jax.ShapeDtypeStruct((SUBLANES, num_f_tiles * LANES), jnp.float32),
        grid_spec=pltpu.PrefetchScalarGridSpec(
            num_scalar_prefetch=0,
            grid=(num_f_tiles, num_n_chunks),
            in_specs=[
                pl.BlockSpec((tn, tr, LANES), lambda j, i: (i, j, 0)),
                pl.BlockSpec((1, tr, LANES), lambda j, i: (0, j, 0)),
            ],
            out_specs=pl.BlockSpec((SUBLANES, LANES), lambda j, i: (0, j)),
            scratch_shapes=[pltpu.VMEM((tr, LANES), jnp.float32)],
        ),
        compiler_params=pltpu.CompilerParams(
            # Feature stream has no carried state -> shard across TensorCores
            # on v7x; the batch-chunk reduction axis stays "arbitrary".
            dimension_semantics=("parallel", "arbitrary"),
            vmem_limit_bytes=vmem_limit,
        ),
    )(x3, y3)

    # Tiny final reduction + MSE mean + weight scaling in plain JAX.
    total_sq = jnp.sum(partials)
    loss = jnp.float32(weight) * (total_sq / jnp.float32(F))
    return loss.reshape(1)   # matches torch: (1,)-shaped tensor


def _reference(x, y, weight=1.0):
    avg = jnp.mean(x.astype(jnp.float32), axis=0, keepdims=True)
    return (jnp.float32(weight)
            * jnp.mean((avg - y.astype(jnp.float32)) ** 2)).reshape(1)


if __name__ == "__main__":
    key = jax.random.PRNGKey(0)
    k = jax.random.split(key, 6)

    # 1) 128-aligned feature extent (free reshape path): N=2, C=4, H=W=16.
    x = jax.random.normal(k[0], (2, 4, 16, 16), dtype=jnp.float32)
    y = jax.random.normal(k[1], (1, 4, 16, 16), dtype=jnp.float32)
    loss = bias_reduce_loss(x, y, weight=1.0)
    jax.block_until_ready(loss)
    ref = _reference(x, y, weight=1.0)
    assert loss.shape == (1,)
    assert jnp.allclose(loss, ref, rtol=1e-4, atol=1e-6), (loss, ref)

    # 2) Ragged feature extent (zero-pad path): F = 3*10*10 = 300.
    xr = jax.random.normal(k[2], (2, 3, 10, 10), dtype=jnp.float32)
    yr = jax.random.normal(k[3], (1, 3, 10, 10), dtype=jnp.float32)
    loss_r = bias_reduce_loss(xr, yr, weight=0.5)
    jax.block_until_ready(loss_r)
    ref_r = _reference(xr, yr, weight=0.5)
    assert jnp.allclose(loss_r, ref_r, rtol=1e-4, atol=1e-6), (loss_r, ref_r)

    # 3) Forced batch chunking (ragged last chunk) + ragged last feature tile:
    #    exercises the VMEM accumulator and both in-kernel masks.
    xc = jax.random.normal(k[4], (3, 3, 32, 32), dtype=jnp.float32)  # F=3072, R=24
    yc = jax.random.normal(k[5], (1, 3, 32, 32), dtype=jnp.float32)
    loss_c = bias_reduce_loss(xc, yc, weight=2.0, tile_n=2, tile_r=16)
    jax.block_until_ready(loss_c)
    ref_c = _reference(xc, yc, weight=2.0)
    assert jnp.allclose(loss_c, ref_c, rtol=1e-4, atol=1e-6), (loss_c, ref_c)

    print("KERNEL_OK")
</pallas_src>

<mosaic_0001>
module attributes {stable_mosaic.version = 11 : i64} {
  func.func @_bias_reduce_kernel(%arg0: i32, %arg1: i32, %arg2: memref<2x8x128xf32, #tpu.memory_space<vmem>>, %arg3: memref<1x8x128xf32, #tpu.memory_space<vmem>>, %arg4: memref<8x128xf32, #tpu.memory_space<vmem>>, %arg5: memref<8x128xf32, #tpu.memory_space<vmem>>) attributes {dimension_semantics = [#tpu.dimension_semantics<parallel>, #tpu.dimension_semantics<arbitrary>], iteration_bounds = array<i64: 1, 1>, scalar_prefetch = 0 : i64, scratch_operands = 1 : i64, tpu.core_type = #tpu.core_type<tc>, window_params = [{transform_indices = @transform_0, window_bounds = array<i64: 2, 8, 128>}, {transform_indices = @transform_1, window_bounds = array<i64: 1, 8, 128>}, {transform_indices = @transform_2, window_bounds = array<i64: 8, 128>}]} {
    %c0_i32 = arith.constant 0 : i32
    %0 = arith.cmpi eq, %arg1, %c0_i32 : i32
    %1 = arith.extui %0 : i1 to i32
    %c0_i32_0 = arith.constant 0 : i32
    %2 = arith.cmpi ne, %1, %c0_i32_0 : i32
    scf.if %2 {
      %cst_9 = arith.constant 0.000000e+00 : f32
      %11 = vector.broadcast %cst_9 : f32 to vector<8x128xf32>
      %c0_10 = arith.constant 0 : index
      %c0_11 = arith.constant 0 : index
      %12 = vector.load %arg5[%c0_10, %c0_11] : memref<8x128xf32, #tpu.memory_space<vmem>>, vector<8x128xf32>
      tpu.vector_store %arg5[%c0_10, %c0_11], %11 {strides = array<i32>} : memref<8x128xf32, #tpu.memory_space<vmem>>, vector<8x128xf32>,
    } else {
    }
    %c0 = arith.constant 0 : index
    %c0_1 = arith.constant 0 : index
    %c0_2 = arith.constant 0 : index
    %3 = vector.load %arg2[%c0, %c0_1, %c0_2] : memref<2x8x128xf32, #tpu.memory_space<vmem>>, vector<2x8x128xf32>
    %c0_3 = arith.constant 0 : index
    %c0_4 = arith.constant 0 : index
    %4 = vector.load %arg5[%c0_3, %c0_4] : memref<8x128xf32, #tpu.memory_space<vmem>>, vector<8x128xf32>
    %cst = arith.constant dense<0.000000e+00> : vector<8x128xf32>
    %5 = vector.multi_reduction <add>, %3, %cst [0] : vector<2x8x128xf32> to vector<8x128xf32>
    %6 = arith.addf %4, %5 : vector<8x128xf32>
    %c0_5 = arith.constant 0 : index
    %c0_6 = arith.constant 0 : index
    %7 = vector.load %arg5[%c0_5, %c0_6] : memref<8x128xf32, #tpu.memory_space<vmem>>, vector<8x128xf32>
    tpu.vector_store %arg5[%c0_5, %c0_6], %6 {strides = array<i32>} : memref<8x128xf32, #tpu.memory_space<vmem>>, vector<8x128xf32>,
    %c0_i32_7 = arith.constant 0 : i32
    %8 = arith.cmpi eq, %arg1, %c0_i32_7 : i32
    %9 = arith.extui %8 : i1 to i32
    %c0_i32_8 = arith.constant 0 : i32
    %10 = arith.cmpi ne, %9, %c0_i32_8 : i32
    scf.if %10 {
      %c0_9 = arith.constant 0 : index
      %c0_10 = arith.constant 0 : index
      %11 = vector.load %arg5[%c0_9, %c0_10] : memref<8x128xf32, #tpu.memory_space<vmem>>, vector<8x128xf32>
      %cst_11 = arith.constant 5.000000e-01 : f32
      %12 = vector.broadcast %cst_11 : f32 to vector<8x128xf32>
      %13 = arith.mulf %11, %12 : vector<8x128xf32>
      %c0_12 = arith.constant 0 : index
      %c0_13 = arith.constant 0 : index
      %c0_14 = arith.constant 0 : index
      %14 = vector.load %arg3[%c0_12, %c0_13, %c0_14] : memref<1x8x128xf32, #tpu.memory_space<vmem>>, vector<1x8x128xf32>
      %15 = vector.shape_cast %14 : vector<1x8x128xf32> to vector<8x128xf32>
      %16 = arith.subf %13, %15 : vector<8x128xf32>
      %17 = arith.mulf %16, %16 : vector<8x128xf32>
      %c0_15 = arith.constant 0 : index
      %c0_16 = arith.constant 0 : index
      %18 = vector.load %arg4[%c0_15, %c0_16] : memref<8x128xf32, #tpu.memory_space<vmem>>, vector<8x128xf32>
      tpu.vector_store %arg4[%c0_15, %c0_16], %17 {strides = array<i32>} : memref<8x128xf32, #tpu.memory_space<vmem>>, vector<8x128xf32>,
    } else {
    }
    return
  }
  func.func @transform_0(%arg0: i32, %arg1: i32) -> (i32, i32, i32) {
    %c0_i32 = arith.constant 0 : i32
    %c0_i32_0 = arith.constant 0 : i32
    return %arg1, %arg0, %c0_i32 : i32, i32, i32
  }
  func.func @transform_1(%arg0: i32, %arg1: i32) -> (i32, i32, i32) {
    %c0_i32 = arith.constant 0 : i32
    %c0_i32_0 = arith.constant 0 : i32
    %c0_i32_1 = arith.constant 0 : i32
    return %c0_i32, %arg0, %c0_i32_0 : i32, i32, i32
  }
  func.func @transform_2(%arg0: i32, %arg1: i32) -> (i32, i32) {
    %c0_i32 = arith.constant 0 : i32
    %c0_i32_0 = arith.constant 0 : i32
    return %c0_i32, %arg0 : i32, i32
  }
}

</mosaic_0001>

<llo_original>
// kernel: tpu_custom_call.1
$region0: #{tpu_custom_call.1}
  #allocation0 [shape = 'u32[]', space=smem, size = 0x4, offset = 0x4, fixed_abs, tag = 'smem constant byte address 0x4 - core index']
  #allocation1 [shape = 'u32[144,128]{1,0:T(1,128)}', space=vmem, size = 0x12000, scoped, tag = 'internal scratch']
  #allocation2 [shape = 'f32[8,128]{1,0:T(8,128)}', space=vmem, size = 0x1000, scoped, tag = 'scratch operand']
  %s0 = inlined_call_operand.hbm [shape: f32[2,8,128], index: 0, kind: input, shape index: {}]
  %s1 = inlined_call_operand.hbm [shape: f32[1,8,128], index: 1, kind: input, shape index: {}]
  %s2 = inlined_call_operand.hbm [shape: f32[8,128], index: 2, kind: output, shape index: {}]
  %s3 = sld [smem:[#allocation0]]
  $region34: #{tpu_custom_call.1} parent=0
    _
  %s5 = ssub.s32 1, %s3
  %s6 = scalar_select 0, %s5, %s3
  $region1: #{tpu_custom_call.1} parent=0
    #allocation3 [shape = 'u8[8192]{0}', space=vmem, size = 0x2000, scoped, tag = 'input window, operand 0, single buffered']
    #allocation4 [shape = 's32[1]{0}', space=sflag, size = 0x4, scoped, tag = 'scoped memory for tpu_custom_call.1']
    #allocation5 [shape = 's32[1]{0}', space=sflag, size = 0x4, scoped, tag = 'scoped memory for tpu_custom_call.1']
    #allocation6 [shape = 'u8[4096]{0}', space=vmem, size = 0x1000, scoped, tag = 'input window, operand 1, single buffered']
    #allocation7 [shape = 's32[1]{0}', space=sflag, size = 0x4, scoped, tag = 'scoped memory for tpu_custom_call.1']
    #allocation8 [shape = 'u8[4096]{0}', space=vmem, size = 0x1000, scoped, tag = 'output window, operand 0, single buffered']
    %7 = vsyncpa [#allocation4], 0
    %8 = vsyncpa [#allocation7], 0
    %9 = vsyncpa [#allocation5], 0
    // Predicated region
    $region2: #{tpu_custom_call.1} parent=1 // pred_check
      _
    $region3: #{tpu_custom_call.1} parent=1 // pred_check_branch
      %11 = sbr.rel (0) target = $region5
    $region4: #{tpu_custom_call.1} parent=1 // pred_region
      %s13 = ssub.s32 256, 256
      %14 = vsyncadd [#allocation4], %s13
      %s15 = sshll.u32 [#allocation3], 4
      %s16 = int_to_ptr.vmem [resolvable:$true] %s15
      %21 = dma.hbm_to_vmem [thread:$0]  %s0, 256, %s16, [#allocation4], 128, 128, 8
    $region5: #{tpu_custom_call.1} parent=1 // pred_fallthru
      _
    // Predicated region
    $region6: #{tpu_custom_call.1} parent=1 // pred_check
      _
    $region7: #{tpu_custom_call.1} parent=1 // pred_check_branch
      %23 = sbr.rel (0) target = $region9
    $region8: #{tpu_custom_call.1} parent=1 // pred_region
      %s25 = ssub.s32 128, 128
      %26 = vsyncadd [#allocation7], %s25
      %s28 = sshll.u32 [#allocation6], 4
      %s29 = int_to_ptr.vmem [resolvable:$true] %s28
      %31 = dma.hbm_to_vmem [thread:$0]  %s1, 128, %s29, [#allocation7]
    $region9: #{tpu_custom_call.1} parent=1 // pred_fallthru
      _
    // Predicated region
    $region10: #{tpu_custom_call.1} parent=1 // pred_check
      _
    $region11: #{tpu_custom_call.1} parent=1 // pred_check_branch
      %33 = sbr.rel (0) target = $region13
    $region12: #{tpu_custom_call.1} parent=1 // pred_region
      %34 = dma.done [#allocation4], 256
    $region13: #{tpu_custom_call.1} parent=1 // pred_fallthru
      _
    // Predicated region
    $region14: #{tpu_custom_call.1} parent=1 // pred_check
      _
    $region15: #{tpu_custom_call.1} parent=1 // pred_check_branch
      %36 = sbr.rel (0) target = $region17
    $region16: #{tpu_custom_call.1} parent=1 // pred_region
      %37 = dma.done [#allocation7], 128
    $region17: #{tpu_custom_call.1} parent=1 // pred_fallthru
      _
    %p38 = scmp.eq.s32.totalorder 0, 0
    // Predicated region
    $region18: #{tpu_custom_call.1} parent=1 // pred_check
      %p39 = pneg %p38
    $region19: #{tpu_custom_call.1} parent=1 // pred_check_branch
      %41 = sbr.rel (%p39) target = $region21
    $region20: #{tpu_custom_call.1} parent=1 // pred_region
      %42 = vst [vmem:[#allocation2] sm:$0xff] 0.0
    $region21: #{tpu_custom_call.1} parent=1 // pred_fallthru
      _
    %v43 = vld [vmem:[#allocation3] sm:$0xff]
    %v44 = vld [vmem:[#allocation3 + $0x8] sm:$0xff]
    %v45 = vld [vmem:[#allocation2] sm:$0xff]
    %v46 = vadd.f32 %v43, %v44
    %v47 = vadd.f32 %v45, %v46
    %48 = vst [vmem:[#allocation2] sm:$0xff] %v47
    // Predicated region
    $region22: #{tpu_custom_call.1} parent=1 // pred_check
      %p49 = pneg %p38
    $region23: #{tpu_custom_call.1} parent=1 // pred_check_branch
      %51 = sbr.rel (%p49) target = $region25
    $region24: #{tpu_custom_call.1} parent=1 // pred_region
      %v52 = vld [vmem:[#allocation2] sm:$0xff]
      %v53 = vmul.f32 %v52, 0.5
      %v54 = vld [vmem:[#allocation6] sm:$0xff]
      %v55 = vsub.f32 %v53, %v54
      %v56 = vmul.f32 %v55, %v55
      %57 = vst [vmem:[#allocation8] sm:$0xff] %v56
    $region25: #{tpu_custom_call.1} parent=1 // pred_fallthru
      _
    // Predicated region
    $region26: #{tpu_custom_call.1} parent=1 // pred_check
      _
    $region27: #{tpu_custom_call.1} parent=1 // pred_check_branch
      %59 = sbr.rel (0) target = $region29
    $region28: #{tpu_custom_call.1} parent=1 // pred_region
      %s61 = ssub.s32 128, 128
      %62 = vsyncadd [#allocation5], %s61
      %s64 = sshll.u32 [#allocation8], 4
      %s65 = int_to_ptr.vmem [resolvable:$true] %s64
      %67 = dma.vmem_to_hbm [thread:$0]  %s65, 128, %s2, [#allocation5]
    $region29: #{tpu_custom_call.1} parent=1 // pred_fallthru
      _
    // Predicated region
    $region30: #{tpu_custom_call.1} parent=1 // pred_check
      _
    $region31: #{tpu_custom_call.1} parent=1 // pred_check_branch
      %69 = sbr.rel (0) target = $region33
    $region32: #{tpu_custom_call.1} parent=1 // pred_region
      %70 = dma.done [#allocation5], 128
    $region33: #{tpu_custom_call.1} parent=1 // pred_fallthru
      _
    %71 = vsyncpa [#allocation4], 1
    %72 = vsyncpa [#allocation7], 1
    %73 = vsyncpa [#allocation5], 1

</llo_original>
